<compile_context>
chip_gen: v6e
topology: v6e:2x2x1
jax: 0.10.0
libtpu: 0.0.40
codegen_flags: <defaults>
</compile_context>

<pallas_src>
import functools

import jax
import jax.numpy as jnp
from jax import lax
from jax.experimental import pallas as pl
from jax.experimental.pallas import tpu as pltpu

INPUT_DIM = 48
OUTPUT_DIM = 1

# synthetic "network" config (network.node_value * network.layers[i].nodes)
NODE_VALUE = 8
LAYER_NODES = [4, 4]
HIDDEN_DIMS = [NODE_VALUE * n for n in LAYER_NODES]   # [32, 32]


def mlp_kernel(x_ref, w1_ref, b1_ref, w2_ref, b2_ref, w3_ref, b3_ref, o_ref):
    # x_ref: (tile_b, 48) f32 block in HBM layout.  bf16 cast happens here (in-kernel,
    # hidden under the x DMA) so x only crosses HBM once, as f32.
    xb = x_ref[...].astype(jnp.bfloat16)

    # Layer 1: h1[o, b] = sum_f w1[o, f] * x[b, f]  ->  (32, tile_b), batch on lanes.
    # NT-form dot_general (both operands contract on their minor dim) is the standard
    # flash-attention q @ k^T pattern; everything downstream is lane-dense.
    h1 = lax.dot_general(w1_ref[...], xb, (((1,), (1,)), ((), ())),
                         preferred_element_type=jnp.float32)
    h1 = jnp.maximum(h1 + b1_ref[...], 0.0).astype(jnp.bfloat16)

    # Layer 2: (32, 32) @ (32, tile_b) + bias, ReLU.
    h2 = jnp.dot(w2_ref[...], h1, preferred_element_type=jnp.float32) + b2_ref[...]
    h2 = jnp.maximum(h2, 0.0).astype(jnp.bfloat16)

    # Layer 3: (1, 32) @ (32, tile_b) -> lane-dense (1, tile_b) output tile.
    out = jnp.dot(w3_ref[...], h2, preferred_element_type=jnp.float32) + b3_ref[...]
    o_ref[...] = out.astype(o_ref.dtype)


@functools.partial(jax.jit, static_argnames=("tile_b",))
def mlp_forward(x, params, tile_b=16384):
    """x: (B, 48) f32, params: PyTorch-style (out,in) weights and (out,1) biases.
    Returns (B, 1) f32 (nn.Sequential layout).

    tile_b is the batch (lane) tile.  Default 16384 fits v7x's 64 MiB VMEM/TC;
    on v5e/v6e (128 MiB VMEM) raise it to 32768..65536 for the best HBM utilization.
    """
    w1, b1, w2, b2, w3, b3 = params
    B = x.shape[0]

    # Clamp the tile for small batches; keep it a multiple of 128 lanes so the
    # (1, tile_b) output tile stays lane-dense, then pad the batch to a tile multiple.
    tile_b = min(tile_b, pl.cdiv(B, 128) * 128)
    padded_B = pl.cdiv(B, tile_b) * tile_b
    n_tiles = padded_B // tile_b
    if padded_B != B:
        # Padded columns compute relu(bias)-derived garbage; they are sliced off below.
        x = jnp.pad(x, ((0, padded_B - B), (0, 0)))

    # Weights are ~5 KiB total: cast once to bf16 for the MXU and keep them
    # VMEM-resident via constant index maps.  Biases stay f32.
    w1b, w2b, w3b = (w.astype(jnp.bfloat16) for w in (w1, w2, w3))

    const = lambda a: pl.BlockSpec(a.shape, lambda i: (0,) * a.ndim)

    flops = 2 * padded_B * (INPUT_DIM * HIDDEN_DIMS[0]
                            + HIDDEN_DIMS[0] * HIDDEN_DIMS[1]
                            + HIDDEN_DIMS[1] * OUTPUT_DIM)
    bytes_accessed = (padded_B * INPUT_DIM * 4
                      + (w1b.size + w2b.size + w3b.size) * 2
                      + (b1.size + b2.size + b3.size) * 4
                      + padded_B * OUTPUT_DIM * 4)

    # VMEM budget: x double buffer is stored lane-padded (48 -> 128 lanes), plus the
    # in-kernel bf16 copy of x and the (32, tile_b) f32/bf16 intermediates.
    vmem_needed = (2 * tile_b * 128 * 4            # x double buffer (lane-padded)
                   + 2 * 8 * tile_b * 4            # (1, tile_b) output double buffer
                   + tile_b * 128 * 2              # bf16 copy of the x tile
                   + tile_b * 32 * (3 * 4 + 2 * 2)  # h1/h2 f32 + bf16 temporaries
                   + (4 << 20))                    # weights/biases + headroom
    vmem_limit = max(32 << 20, min(vmem_needed, 120 << 20))

    outT = pl.pallas_call(
        mlp_kernel,
        out_shape=jax.ShapeDtypeStruct((OUTPUT_DIM, padded_B), jnp.float32),
        grid_spec=pltpu.PrefetchScalarGridSpec(
            num_scalar_prefetch=0,
            grid=(n_tiles,),
            in_specs=[
                pl.BlockSpec((tile_b, INPUT_DIM), lambda i: (i, 0)),  # x batch tile
                const(w1b), const(b1),
                const(w2b), const(b2),
                const(w3b), const(b3),
            ],
            out_specs=pl.BlockSpec((OUTPUT_DIM, tile_b), lambda i: (0, i)),
        ),
        compiler_params=pltpu.CompilerParams(
            dimension_semantics=("parallel",),   # v7x: shard batch grid over both TCs
            vmem_limit_bytes=vmem_limit,
        ),
        cost_estimate=pl.CostEstimate(
            flops=flops, transcendentals=0, bytes_accessed=bytes_accessed),
    )(x, w1b, b1, w2b, b2, w3b, b3)

    # Drop batch padding and return in the PyTorch (B, 1) layout (tiny reshape).
    return jnp.reshape(outT[0, :B], (B, OUTPUT_DIM))


def init_params(key):
    """Deterministic init mirroring the PyTorch module's layer shapes.
    Weights are PyTorch-style (out_features, in_features); biases (out_features, 1)."""
    dims = [INPUT_DIM] + HIDDEN_DIMS + [OUTPUT_DIM]
    params = []
    for i in range(len(dims) - 1):
        key, kw, kb = jax.random.split(key, 3)
        bound = 1.0 / (dims[i] ** 0.5)
        w = jax.random.uniform(kw, (dims[i + 1], dims[i]), jnp.float32, -bound, bound)
        b = jax.random.uniform(kb, (dims[i + 1], 1), jnp.float32, -bound, bound)
        params += [w, b]
    return params


def reference_forward(x, params):
    """Plain-XLA reference mirroring the kernel's numerics
    (bf16 matmul operands, f32 accumulation, f32 biases)."""
    w1, b1, w2, b2, w3, b3 = params
    xb = x.astype(jnp.bfloat16)
    w1b, w2b, w3b = (w.astype(jnp.bfloat16) for w in (w1, w2, w3))
    h1 = jnp.maximum(
        jnp.dot(xb, w1b.T, preferred_element_type=jnp.float32) + b1.T, 0.0
    ).astype(jnp.bfloat16)
    h2 = jnp.maximum(
        jnp.dot(h1, w2b.T, preferred_element_type=jnp.float32) + b2.T, 0.0
    ).astype(jnp.bfloat16)
    return jnp.dot(h2, w3b.T, preferred_element_type=jnp.float32) + b3.T


if __name__ == "__main__":
    key = jax.random.PRNGKey(0)
    key, kx = jax.random.split(key)

    batch = 200   # small; exercises batch padding (200 -> 256) and tile clamping
    x = jax.random.normal(kx, (batch, INPUT_DIM), jnp.float32)
    params = init_params(key)

    out = jax.block_until_ready(mlp_forward(x, params))
    ref = reference_forward(x, params)

    assert out.shape == (batch, OUTPUT_DIM)
    assert jnp.allclose(out, ref, atol=1e-3, rtol=1e-3), "mismatch vs reference"

    print("KERNEL_OK")
</pallas_src>

<mosaic_0001>
module attributes {stable_mosaic.version = 11 : i64} {
  func.func @mlp_kernel(%arg0: i32, %arg1: memref<256x48xf32, #tpu.memory_space<vmem>>, %arg2: memref<32x48xbf16, #tpu.memory_space<vmem>>, %arg3: memref<32x1xf32, #tpu.memory_space<vmem>>, %arg4: memref<32x32xbf16, #tpu.memory_space<vmem>>, %arg5: memref<32x1xf32, #tpu.memory_space<vmem>>, %arg6: memref<1x32xbf16, #tpu.memory_space<vmem>>, %arg7: memref<1x1xf32, #tpu.memory_space<vmem>>, %arg8: memref<1x256xf32, #tpu.memory_space<vmem>>) attributes {dimension_semantics = [#tpu.dimension_semantics<parallel>], iteration_bounds = array<i64: 1>, scalar_prefetch = 0 : i64, scratch_operands = 0 : i64, tpu.core_type = #tpu.core_type<tc>, window_params = [{transform_indices = @transform_0, window_bounds = array<i64: 256, 48>}, {pipeline_mode = #tpu.pipeline_mode<synchronous>, transform_indices = @transform_1, window_bounds = array<i64: 32, 48>}, {pipeline_mode = #tpu.pipeline_mode<synchronous>, transform_indices = @transform_2, window_bounds = array<i64: 32, 1>}, {pipeline_mode = #tpu.pipeline_mode<synchronous>, transform_indices = @transform_3, window_bounds = array<i64: 32, 32>}, {pipeline_mode = #tpu.pipeline_mode<synchronous>, transform_indices = @transform_4, window_bounds = array<i64: 32, 1>}, {pipeline_mode = #tpu.pipeline_mode<synchronous>, transform_indices = @transform_5, window_bounds = array<i64: 1, 32>}, {pipeline_mode = #tpu.pipeline_mode<synchronous>, transform_indices = @transform_6, window_bounds = array<i64: 1, 1>}, {transform_indices = @transform_7, window_bounds = array<i64: 1, 256>}]} {
    %c0 = arith.constant 0 : index
    %c0_0 = arith.constant 0 : index
    %0 = vector.load %arg1[%c0, %c0_0] : memref<256x48xf32, #tpu.memory_space<vmem>>, vector<256x48xf32>
    %1 = arith.truncf %0 : vector<256x48xf32> to vector<256x48xbf16>
    %c0_1 = arith.constant 0 : index
    %c0_2 = arith.constant 0 : index
    %2 = vector.load %arg2[%c0_1, %c0_2] : memref<32x48xbf16, #tpu.memory_space<vmem>>, vector<32x48xbf16>
    %cst = arith.constant dense<0.000000e+00> : vector<32x256xf32>
    %3 = tpu.matmul %2, %1, %cst {dimension_numbers = #tpu.dot_dimension_numbers<[1], [1], [0], [0], [0, 0, 1, 0], [], []>} : vector<32x48xbf16>, vector<256x48xbf16>, vector<32x256xf32> -> vector<32x256xf32>
    %c0_3 = arith.constant 0 : index
    %c0_4 = arith.constant 0 : index
    %4 = vector.load %arg3[%c0_3, %c0_4] : memref<32x1xf32, #tpu.memory_space<vmem>>, vector<32x1xf32>
    %5 = vector.broadcast %4 : vector<32x1xf32> to vector<32x256xf32>
    %6 = arith.addf %3, %5 : vector<32x256xf32>
    %cst_5 = arith.constant 0.000000e+00 : f32
    %7 = vector.broadcast %cst_5 : f32 to vector<32x256xf32>
    %8 = arith.maximumf %6, %7 : vector<32x256xf32>
    %9 = arith.truncf %8 : vector<32x256xf32> to vector<32x256xbf16>
    %c0_6 = arith.constant 0 : index
    %c0_7 = arith.constant 0 : index
    %10 = vector.load %arg4[%c0_6, %c0_7] : memref<32x32xbf16, #tpu.memory_space<vmem>>, vector<32x32xbf16>
    %cst_8 = arith.constant dense<0.000000e+00> : vector<32x256xf32>
    %11 = tpu.matmul %10, %9, %cst_8 {dimension_numbers = #tpu.dot_dimension_numbers<[1], [0], [0], [1], [0, 0, 1, 1], [], []>} : vector<32x32xbf16>, vector<32x256xbf16>, vector<32x256xf32> -> vector<32x256xf32>
    %c0_9 = arith.constant 0 : index
    %c0_10 = arith.constant 0 : index
    %12 = vector.load %arg5[%c0_9, %c0_10] : memref<32x1xf32, #tpu.memory_space<vmem>>, vector<32x1xf32>
    %13 = vector.broadcast %12 : vector<32x1xf32> to vector<32x256xf32>
    %14 = arith.addf %11, %13 : vector<32x256xf32>
    %cst_11 = arith.constant 0.000000e+00 : f32
    %15 = vector.broadcast %cst_11 : f32 to vector<32x256xf32>
    %16 = arith.maximumf %14, %15 : vector<32x256xf32>
    %17 = arith.truncf %16 : vector<32x256xf32> to vector<32x256xbf16>
    %c0_12 = arith.constant 0 : index
    %c0_13 = arith.constant 0 : index
    %18 = vector.load %arg6[%c0_12, %c0_13] : memref<1x32xbf16, #tpu.memory_space<vmem>>, vector<1x32xbf16>
    %cst_14 = arith.constant dense<0.000000e+00> : vector<1x256xf32>
    %19 = tpu.matmul %18, %17, %cst_14 {dimension_numbers = #tpu.dot_dimension_numbers<[1], [0], [0], [1], [0, 0, 1, 1], [], []>} : vector<1x32xbf16>, vector<32x256xbf16>, vector<1x256xf32> -> vector<1x256xf32>
    %c0_15 = arith.constant 0 : index
    %c0_16 = arith.constant 0 : index
    %20 = vector.load %arg7[%c0_15, %c0_16] : memref<1x1xf32, #tpu.memory_space<vmem>>, vector<1x1xf32>
    %21 = vector.broadcast %20 : vector<1x1xf32> to vector<1x256xf32>
    %22 = arith.addf %19, %21 : vector<1x256xf32>
    %c0_17 = arith.constant 0 : index
    %c0_18 = arith.constant 0 : index
    %23 = vector.load %arg8[%c0_17, %c0_18] : memref<1x256xf32, #tpu.memory_space<vmem>>, vector<1x256xf32>
    tpu.vector_store %arg8[%c0_17, %c0_18], %22 {strides = array<i32>} : memref<1x256xf32, #tpu.memory_space<vmem>>, vector<1x256xf32>,
    return
  }
  func.func @transform_0(%arg0: i32) -> (i32, i32) {
    %c0_i32 = arith.constant 0 : i32
    %c0_i32_0 = arith.constant 0 : i32
    return %arg0, %c0_i32 : i32, i32
  }
  func.func @transform_1(%arg0: i32) -> (i32, i32) {
    %c0_i32 = arith.constant 0 : i32
    %c0_i32_0 = arith.constant 0 : i32
    %c0_i32_1 = arith.constant 0 : i32
    return %c0_i32, %c0_i32_0 : i32, i32
  }
  func.func @transform_2(%arg0: i32) -> (i32, i32) {
    %c0_i32 = arith.constant 0 : i32
    %c0_i32_0 = arith.constant 0 : i32
    %c0_i32_1 = arith.constant 0 : i32
    return %c0_i32, %c0_i32_0 : i32, i32
  }
  func.func @transform_3(%arg0: i32) -> (i32, i32) {
    %c0_i32 = arith.constant 0 : i32
    %c0_i32_0 = arith.constant 0 : i32
    %c0_i32_1 = arith.constant 0 : i32
    return %c0_i32, %c0_i32_0 : i32, i32
  }
  func.func @transform_4(%arg0: i32) -> (i32, i32) {
    %c0_i32 = arith.constant 0 : i32
    %c0_i32_0 = arith.constant 0 : i32
    %c0_i32_1 = arith.constant 0 : i32
    return %c0_i32, %c0_i32_0 : i32, i32
  }
  func.func @transform_5(%arg0: i32) -> (i32, i32) {
    %c0_i32 = arith.constant 0 : i32
    %c0_i32_0 = arith.constant 0 : i32
    %c0_i32_1 = arith.constant 0 : i32
    return %c0_i32, %c0_i32_0 : i32, i32
  }
  func.func @transform_6(%arg0: i32) -> (i32, i32) {
    %c0_i32 = arith.constant 0 : i32
    %c0_i32_0 = arith.constant 0 : i32
    %c0_i32_1 = arith.constant 0 : i32
    return %c0_i32, %c0_i32_0 : i32, i32
  }
  func.func @transform_7(%arg0: i32) -> (i32, i32) {
    %c0_i32 = arith.constant 0 : i32
    %c0_i32_0 = arith.constant 0 : i32
    return %c0_i32, %arg0 : i32, i32
  }
}

</mosaic_0001>

<llo_original>
// kernel: mlp_forward.1
$region0: #{mlp_forward.1}
  #allocation0 [shape = 'u32[]', space=smem, size = 0x4, offset = 0x4, fixed_abs, tag = 'smem constant byte address 0x4 - core index']
  #allocation1 [shape = 'u32[144,128]{1,0:T(1,128)}', space=vmem, size = 0x12000, scoped, tag = 'internal scratch']
  #allocation2 [shape = 'f32[1,1]{1,0:T(1,128)S(1)}', space=vmem, size = 0x200, scoped, tag = 'scoped memory for mlp_forward.1']
  %s0 = inlined_call_operand.vmem [shape: f32[256,48], index: 0, kind: input, shape index: {}]
  %s1 = inlined_call_operand.vmem [shape: bf16[32,48], index: 1, kind: input, shape index: {}]
  %s2 = inlined_call_operand.vmem [shape: f32[32,1], index: 2, kind: input, shape index: {}]
  %s3 = inlined_call_operand.vmem [shape: bf16[32,32], index: 3, kind: input, shape index: {}]
  %s4 = inlined_call_operand.vmem [shape: f32[32,1], index: 4, kind: input, shape index: {}]
  %s5 = inlined_call_operand.vmem [shape: bf16[1,32], index: 5, kind: input, shape index: {}]
  %s6 = inlined_call_operand.<no memory space> [shape: f32[1,1], index: 6, kind: input, shape index: {}]
  %s7 = inlined_call_operand.vmem [shape: f32[1,256], index: 7, kind: output, shape index: {}]
  %s8 = sld [smem:[#allocation0]]
  $region38: #{mlp_forward.1} parent=0
    _
  %s10 = ssub.s32 1, %s8
  %s11 = scalar_select 0, %s10, %s8
  %v12 = vstv %s6
  %13 = vst [vmem:[#allocation2] sm:$0x1] %v12
  // Predicated region
  $region2: #{mlp_forward.1} parent=0 // pred_check
    _
  $region3: #{mlp_forward.1} parent=0 // pred_check_branch
    %15 = sbr.rel (0) target = $region5
  $region4: #{mlp_forward.1} parent=0 // pred_region
    _
  $region5: #{mlp_forward.1} parent=0 // pred_fallthru
    _
  // Predicated region
  $region6: #{mlp_forward.1} parent=0 // pred_check
    _
  $region7: #{mlp_forward.1} parent=0 // pred_check_branch
    %17 = sbr.rel (0) target = $region9
  $region8: #{mlp_forward.1} parent=0 // pred_region
    _
  $region9: #{mlp_forward.1} parent=0 // pred_fallthru
    _
  // Predicated region
  $region10: #{mlp_forward.1} parent=0 // pred_check
    _
  $region11: #{mlp_forward.1} parent=0 // pred_check_branch
    %19 = sbr.rel (0) target = $region13
  $region12: #{mlp_forward.1} parent=0 // pred_region
    _
  $region13: #{mlp_forward.1} parent=0 // pred_fallthru
    _
  // Predicated region
  $region14: #{mlp_forward.1} parent=0 // pred_check
    _
  $region15: #{mlp_forward.1} parent=0 // pred_check_branch
    %21 = sbr.rel (0) target = $region17
  $region16: #{mlp_forward.1} parent=0 // pred_region
    _
  $region17: #{mlp_forward.1} parent=0 // pred_fallthru
    _
  // Predicated region
  $region18: #{mlp_forward.1} parent=0 // pred_check
    _
  $region19: #{mlp_forward.1} parent=0 // pred_check_branch
    %23 = sbr.rel (0) target = $region21
  $region20: #{mlp_forward.1} parent=0 // pred_region
    _
  $region21: #{mlp_forward.1} parent=0 // pred_fallthru
    _
  // Predicated region
  $region22: #{mlp_forward.1} parent=0 // pred_check
    _
  $region23: #{mlp_forward.1} parent=0 // pred_check_branch
    %25 = sbr.rel (0) target = $region25
  $region24: #{mlp_forward.1} parent=0 // pred_region
    _
  $region25: #{mlp_forward.1} parent=0 // pred_fallthru
    _
  // Predicated region
  $region26: #{mlp_forward.1} parent=0 // pred_check
    _
  $region27: #{mlp_forward.1} parent=0 // pred_check_branch
    %27 = sbr.rel (0) target = $region29
  $region28: #{mlp_forward.1} parent=0 // pred_region
    _
  $region29: #{mlp_forward.1} parent=0 // pred_fallthru
    _
  %v29 = vld [vmem:[%s0] sm:$0xff]
  %v30 = vld [vmem:[%s0 + $0x8] sm:$0xff]
  %v31 = vld [vmem:[%s0 + $0x10] sm:$0xff]
  %v32 = vld [vmem:[%s0 + $0x18] sm:$0xff]
  %v33 = vld [vmem:[%s0 + $0x20] sm:$0xff]
  %v34 = vld [vmem:[%s0 + $0x28] sm:$0xff]
  %v35 = vld [vmem:[%s0 + $0x30] sm:$0xff]
  %v36 = vld [vmem:[%s0 + $0x38] sm:$0xff]
  %v37 = vld [vmem:[%s0 + $0x40] sm:$0xff]
  %v38 = vld [vmem:[%s0 + $0x48] sm:$0xff]
  %v39 = vld [vmem:[%s0 + $0x50] sm:$0xff]
  %v40 = vld [vmem:[%s0 + $0x58] sm:$0xff]
  %v41 = vld [vmem:[%s0 + $0x60] sm:$0xff]
  %v42 = vld [vmem:[%s0 + $0x68] sm:$0xff]
  %v43 = vld [vmem:[%s0 + $0x70] sm:$0xff]
  %v44 = vld [vmem:[%s0 + $0x78] sm:$0xff]
  %v45 = vld [vmem:[%s0 + $0x80] sm:$0xff]
  %v46 = vld [vmem:[%s0 + $0x88] sm:$0xff]
  %v47 = vld [vmem:[%s0 + $0x90] sm:$0xff]
  %v48 = vld [vmem:[%s0 + $0x98] sm:$0xff]
  %v49 = vld [vmem:[%s0 + $0xa0] sm:$0xff]
  %v50 = vld [vmem:[%s0 + $0xa8] sm:$0xff]
  %v51 = vld [vmem:[%s0 + $0xb0] sm:$0xff]
  %v52 = vld [vmem:[%s0 + $0xb8] sm:$0xff]
  %v53 = vld [vmem:[%s0 + $0xc0] sm:$0xff]
  %v54 = vld [vmem:[%s0 + $0xc8] sm:$0xff]
  %v55 = vld [vmem:[%s0 + $0xd0] sm:$0xff]
  %v56 = vld [vmem:[%s0 + $0xd8] sm:$0xff]
  %v57 = vld [vmem:[%s0 + $0xe0] sm:$0xff]
  %v58 = vld [vmem:[%s0 + $0xe8] sm:$0xff]
  %v59 = vld [vmem:[%s0 + $0xf0] sm:$0xff]
  %v60 = vld [vmem:[%s0 + $0xf8] sm:$0xff]
  %v61 = vpack.c.bf16 %v30, %v29
  %v62 = vpack.c.bf16 %v32, %v31
  %v63 = vpack.c.bf16 %v34, %v33
  %v64 = vpack.c.bf16 %v36, %v35
  %v65 = vpack.c.bf16 %v38, %v37
  %v66 = vpack.c.bf16 %v40, %v39
  %v67 = vpack.c.bf16 %v42, %v41
  %v68 = vpack.c.bf16 %v44, %v43
  %v69 = vpack.c.bf16 %v46, %v45
  %v70 = vpack.c.bf16 %v48, %v47
  %v71 = vpack.c.bf16 %v50, %v49
  %v72 = vpack.c.bf16 %v52, %v51
  %v73 = vpack.c.bf16 %v54, %v53
  %v74 = vpack.c.bf16 %v56, %v55
  %v75 = vpack.c.bf16 %v58, %v57
  %v76 = vpack.c.bf16 %v60, %v59
  %v77 = vld [vmem:[%s1] sm:$0xf]
  %v78 = vld [vmem:[%s1 + $0x4] sm:$0xf]
  %v79 = vld [vmem:[%s1 + $0x8] sm:$0xf]
  %v80 = vld [vmem:[%s1 + $0xc] sm:$0xf]
  %v81 = vld [vmem:[%s2] sm:$0xff]
  %v82 = vld [vmem:[%s2 + $0x8] sm:$0xff]
  %v83 = vld [vmem:[%s2 + $0x10] sm:$0xff]
  %v84 = vld [vmem:[%s2 + $0x18] sm:$0xff]
  %86 = vset.pattern.permute.xlu0 0
  %87 = vperm.xlu0 %86, %v81
  %v88 = vpop.permute.xlu0 %87
  %91 = vset.pattern.permute.xlu0 0
  %92 = vperm.xlu0 %91, %v82
  %v93 = vpop.permute.xlu0 %92
  %96 = vset.pattern.permute.xlu0 0
  %97 = vperm.xlu0 %96, %v83
  %v98 = vpop.permute.xlu0 %97
  %101 = vset.pattern.permute.xlu0 0
  %102 = vperm.xlu0 %101, %v84
  %v103 = vpop.permute.xlu0 %102
  %v109 = vunpack.c.l.b16 %v77
  %v110 = vunpack.c.l.b16 %v78
  %v111 = vunpack.c.l.b16 %v79
  %v112 = vunpack.c.l.b16 %v80
  %v113 = vpack.c.b16 %v110, %v109
  %v114 = vpack.c.b16 %v112, %v111
  %vm115 = vcmask 392192
  %v117 = vsel %vm115, %v113, 0
  %v120 = vsel %vm115, %v114, 0
  %v123 = vsel %vm115, %v61, 0
  %v126 = vsel %vm115, %v62, 0
  %v129 = vsel %vm115, %v63, 0
  %v132 = vsel %vm115, %v64, 0
  %v135 = vsel %vm115, %v65, 0
  %v138 = vsel %vm115, %v66, 0
  %v141 = vsel %vm115, %v67, 0
  %v144 = vsel %vm115, %v68, 0
  %v147 = vsel %vm115, %v69, 0
  %v150 = vsel %vm115, %v70, 0
  %v153 = vsel %vm115, %v71, 0
  %v156 = vsel %vm115, %v72, 0
  %v159 = vsel %vm115, %v73, 0
  %v162 = vsel %vm115, %v74, 0
  %v165 = vsel %vm115, %v75, 0
  %v168 = vsel %vm115, %v76, 0
  %170 = vmatprep.subr.bf16.mxu0 0
  %171 = vmatpush1.bf16.xpose.msra.mxu0 %v144
  %172 = vmatprep.subr.bf16.mxu0 0
  %173 = vmatpush1.bf16.xpose.msra.mxu0 %v141
  %174 = vmatprep.subr.bf16.mxu0 0
  %175 = vmatpush1.bf16.xpose.msra.mxu0 %v138
  %176 = vmatprep.subr.bf16.mxu0 0
  %177 = vmatpush1.bf16.xpose.msra.mxu0 %v135
  %178 = vmatprep.subr.bf16.mxu0 0
  %179 = vmatpush1.bf16.xpose.msra.mxu0 %v132
  %180 = vmatprep.subr.bf16.mxu0 0
  %181 = vmatpush1.bf16.xpose.msra.mxu0 %v129
  %182 = vmatprep.subr.bf16.mxu0 0
  %183 = vmatpush1.bf16.xpose.msra.mxu0 %v126
  %184 = vmatprep.subr.bf16.mxu0 0
  %185 = vmatpush1.bf16.xpose.msra.mxu0 %v123
  %186 = vmatprep.subr.bf16.mxu0 0
  %187 = vmatpush2.bf16.xpose.msra.mxu0 %v168
  %188 = vmatprep.subr.bf16.mxu0 0
  %189 = vmatpush2.bf16.xpose.msra.mxu0 %v165
  %190 = vmatprep.subr.bf16.mxu0 0
  %191 = vmatpush2.bf16.xpose.msra.mxu0 %v162
  %192 = vmatprep.subr.bf16.mxu0 0
  %193 = vmatpush2.bf16.xpose.msra.mxu0 %v159
  %194 = vmatprep.subr.bf16.mxu0 0
  %195 = vmatpush2.bf16.xpose.msra.mxu0 %v156
  %196 = vmatprep.subr.bf16.mxu0 0
  %197 = vmatpush2.bf16.xpose.msra.mxu0 %v153
  %198 = vmatprep.subr.bf16.mxu0 0
  %199 = vmatpush2.bf16.xpose.msra.mxu0 %v150
  %200 = vmatprep.subr.bf16.mxu0 0
  %201 = vmatpush2.bf16.xpose.msra.mxu0 %v147
  %202 = vmatprep.mubr.bf16.mxu0 0
  %203 = vmatmul.mubr.bf16.gmra.mxu0 %v117
  %v204 = vpop.f32.mrf.mxu0
  %v205 = vadd.f32 %v88, %v204
  %v206 = vpop.f32.mrf.mxu0
  %v207 = vadd.f32 %v88, %v206
  %v208 = vpop.f32.mrf.mxu0
  %v209 = vadd.f32 %v93, %v208
  %v210 = vpop.f32.mrf.mxu0
  %v211 = vadd.f32 %v93, %v210
  %212 = vmatprep.mubr.bf16.mxu0 0
  %213 = vmatmul.mubr.bf16.gmra.mxu0 %v120
  %v214 = vpop.f32.mrf.mxu0
  %v215 = vadd.f32 %v98, %v214
  %v216 = vpop.f32.mrf.mxu0
  %v217 = vadd.f32 %v98, %v216
  %v218 = vpop.f32.mrf.mxu0
  %v219 = vadd.f32 %v103, %v218
  %v220 = vpop.f32.mrf.mxu0
  %v221 = vadd.f32 %v103, %v220
  %222 = vdwg.mxu0
  %v223 = vmax.f32 %v205, 0.0
  %v224 = vmax.f32 %v207, 0.0
  %v225 = vmax.f32 %v209, 0.0
  %v226 = vmax.f32 %v211, 0.0
  %v227 = vmax.f32 %v215, 0.0
  %v228 = vmax.f32 %v217, 0.0
  %v229 = vmax.f32 %v219, 0.0
  %v230 = vmax.f32 %v221, 0.0
  %v231 = vpack.c.bf16 %v225, %v223
  %v232 = vpack.c.bf16 %v226, %v224
  %v233 = vpack.c.bf16 %v229, %v227
  %v234 = vpack.c.bf16 %v230, %v228
  %v235 = vld [vmem:[%s3] sm:$0xf]
  %v236 = vld [vmem:[%s3 + $0x4] sm:$0xf]
  %v237 = vld [vmem:[%s3 + $0x8] sm:$0xf]
  %v238 = vld [vmem:[%s3 + $0xc] sm:$0xf]
  %v239 = vld [vmem:[%s4] sm:$0xff]
  %v240 = vld [vmem:[%s4 + $0x8] sm:$0xff]
  %v241 = vld [vmem:[%s4 + $0x10] sm:$0xff]
  %v242 = vld [vmem:[%s4 + $0x18] sm:$0xff]
  %244 = vset.pattern.permute.xlu0 0
  %245 = vperm.xlu0 %244, %v239
  %v246 = vpop.permute.xlu0 %245
  %249 = vset.pattern.permute.xlu0 0
  %250 = vperm.xlu0 %249, %v240
  %v251 = vpop.permute.xlu0 %250
  %254 = vset.pattern.permute.xlu0 0
  %255 = vperm.xlu0 %254, %v241
  %v256 = vpop.permute.xlu0 %255
  %259 = vset.pattern.permute.xlu0 0
  %260 = vperm.xlu0 %259, %v242
  %v261 = vpop.permute.xlu0 %260
  %v267 = vunpack.c.l.b16 %v235
  %v268 = vunpack.c.l.b16 %v236
  %v269 = vunpack.c.l.b16 %v237
  %v270 = vunpack.c.l.b16 %v238
  %v271 = vpack.c.b16 %v268, %v267
  %v272 = vpack.c.b16 %v270, %v269
  %vm273 = vcmask 261120
  %v275 = vsel %vm273, %v271, 0
  %v278 = vsel %vm273, %v272, 0
  %280 = vmatprep.subr.bf16.mxu0 0
  %281 = vmatpush1.bf16.msra.mxu0 0
  %282 = vmatprep.subr.bf16.mxu0 0
  %283 = vmatpush1.bf16.msra.mxu0 0
  %284 = vmatprep.subr.bf16.mxu0 0
  %285 = vmatpush1.bf16.msra.mxu0 0
  %286 = vmatprep.subr.bf16.mxu0 0
  %287 = vmatpush1.bf16.msra.mxu0 0
  %288 = vmatprep.subr.bf16.mxu0 0
  %289 = vmatpush1.bf16.msra.mxu0 0
  %290 = vmatprep.subr.bf16.mxu0 0
  %291 = vmatpush1.bf16.msra.mxu0 0
  %292 = vmatprep.subr.bf16.mxu0 %v234
  %293 = vmatpush1.bf16.msra.mxu0 %v233
  %294 = vmatprep.subr.bf16.mxu0 %v232
  %295 = vmatpush1.bf16.msra.mxu0 %v231
  %296 = vmatprep.subr.bf16.mxu0 0
  %297 = vmatpush2.bf16.msra.mxu0 0
  %298 = vmatprep.subr.bf16.mxu0 0
  %299 = vmatpush2.bf16.msra.mxu0 0
  %300 = vmatprep.subr.bf16.mxu0 0
  %301 = vmatpush2.bf16.msra.mxu0 0
  %302 = vmatprep.subr.bf16.mxu0 0
  %303 = vmatpush2.bf16.msra.mxu0 0
  %304 = vmatprep.subr.bf16.mxu0 0
  %305 = vmatpush2.bf16.msra.mxu0 0
  %306 = vmatprep.subr.bf16.mxu0 0
  %307 = vmatpush2.bf16.msra.mxu0 0
  %308 = vmatprep.subr.bf16.mxu0 0
  %309 = vmatpush2.bf16.msra.mxu0 0
  %310 = vmatprep.subr.bf16.mxu0 0
  %311 = vmatpush2.bf16.msra.mxu0 0
  %312 = vmatprep.mubr.bf16.mxu0 0
  %313 = vmatmul.mubr.bf16.gmra.mxu0 %v275
  %v314 = vpop.f32.mrf.mxu0
  %v315 = vadd.f32 %v246, %v314
  %v316 = vpop.f32.mrf.mxu0
  %v317 = vadd.f32 %v246, %v316
  %v318 = vpop.f32.mrf.mxu0
  %v319 = vadd.f32 %v251, %v318
  %v320 = vpop.f32.mrf.mxu0
  %v321 = vadd.f32 %v251, %v320
  %322 = vmatprep.mubr.bf16.mxu0 0
  %323 = vmatmul.mubr.bf16.gmra.mxu0 %v278
  %v324 = vpop.f32.mrf.mxu0
  %v325 = vadd.f32 %v256, %v324
  %v326 = vpop.f32.mrf.mxu0
  %v327 = vadd.f32 %v256, %v326
  %v328 = vpop.f32.mrf.mxu0
  %v329 = vadd.f32 %v261, %v328
  %v330 = vpop.f32.mrf.mxu0
  %v331 = vadd.f32 %v261, %v330
  %332 = vdwg.mxu0
  %v333 = vmax.f32 %v315, 0.0
  %v334 = vmax.f32 %v317, 0.0
  %v335 = vmax.f32 %v319, 0.0
  %v336 = vmax.f32 %v321, 0.0
  %v337 = vmax.f32 %v325, 0.0
  %v338 = vmax.f32 %v327, 0.0
  %v339 = vmax.f32 %v329, 0.0
  %v340 = vmax.f32 %v331, 0.0
  %v341 = vpack.c.bf16 %v335, %v333
  %v342 = vpack.c.bf16 %v336, %v334
  %v343 = vpack.c.bf16 %v339, %v337
  %v344 = vpack.c.bf16 %v340, %v338
  %v345 = vld [vmem:[%s5] sm:$0x1]
  %v346 = vld [vmem:[#allocation2] sm:$0x1]
  %348 = vset.pattern.permute.xlu0 0
  %349 = vperm.xlu0 %348, %v346
  %v350 = vpop.permute.xlu0 %349
  %v352 = vlaneseq
  %v353 = vshrl.u32 %v352, 7
  %v354 = vsub.s32 0, %v353
  %v355 = vrot.slane %v350, %v354
  %v357 = vsel %vm273, %v345, 0
  %359 = vmatprep.subr.bf16.mxu0 0
  %360 = vmatpush1.bf16.msra.mxu0 0
  %361 = vmatprep.subr.bf16.mxu0 0
  %362 = vmatpush1.bf16.msra.mxu0 0
  %363 = vmatprep.subr.bf16.mxu0 0
  %364 = vmatpush1.bf16.msra.mxu0 0
  %365 = vmatprep.subr.bf16.mxu0 0
  %366 = vmatpush1.bf16.msra.mxu0 0
  %367 = vmatprep.subr.bf16.mxu0 0
  %368 = vmatpush1.bf16.msra.mxu0 0
  %369 = vmatprep.subr.bf16.mxu0 0
  %370 = vmatpush1.bf16.msra.mxu0 0
  %371 = vmatprep.subr.bf16.mxu0 %v344
  %372 = vmatpush1.bf16.msra.mxu0 %v343
  %373 = vmatprep.subr.bf16.mxu0 %v342
  %374 = vmatpush1.bf16.msra.mxu0 %v341
  %375 = vmatprep.subr.bf16.mxu0 0
  %376 = vmatpush2.bf16.msra.mxu0 0
  %377 = vmatprep.subr.bf16.mxu0 0
  %378 = vmatpush2.bf16.msra.mxu0 0
  %379 = vmatprep.subr.bf16.mxu0 0
  %380 = vmatpush2.bf16.msra.mxu0 0
  %381 = vmatprep.subr.bf16.mxu0 0
  %382 = vmatpush2.bf16.msra.mxu0 0
  %383 = vmatprep.subr.bf16.mxu0 0
  %384 = vmatpush2.bf16.msra.mxu0 0
  %385 = vmatprep.subr.bf16.mxu0 0
  %386 = vmatpush2.bf16.msra.mxu0 0
  %387 = vmatprep.subr.bf16.mxu0 0
  %388 = vmatpush2.bf16.msra.mxu0 0
  %389 = vmatprep.subr.bf16.mxu0 0
  %390 = vmatpush2.bf16.msra.mxu0 0
  %391 = vmatprep.mubr.bf16.mxu0 0
  %392 = vmatmul.mubr.bf16.gmra.mxu0 %v357
  %v393 = vpop.f32.mrf.mxu0
  %v394 = vadd.f32 %v355, %v393
  %v395 = vpop.f32.mrf.mxu0
  %v396 = vadd.f32 %v355, %v395
  %v397 = vpop.f32.mrf.mxu0
  %v398 = vpop.f32.mrf.mxu0
  %399 = vdwg.mxu0
  %v402 = vcombine.low %v394, %v396
  %v404 = vunpack.c.l.s4 1966171168
  %v405 = vunpack.c.0.s8 %v404
  %v406 = vlaneseq
  %v407 = vshrl.u32 %v406, 7
  %v408 = vsub.s32 %v405, %v407
  %v409 = vrot.slane %v402, %v408
  %v411 = vunpack.c.l.s4 1966171168
  %v412 = vunpack.c.0.s8 %v411
  %v413 = vlaneseq
  %v414 = vshrl.u32 %v413, 7
  %v415 = vsub.s32 %v412, %v414
  %v416 = vrot.slane %v409, %v415
  %v418 = vlaneseq
  %vm419 = vcmp.ge.s32.totalorder %v418, 0
  %vm420 = vcmp.lt.s32.totalorder %v418, 256
  %vm421 = vmand %vm419, %vm420
  %422 = vst.msk [vmem:[%s7] sm:$0x3] %vm421, %v416
  // Predicated region
  $region30: #{mlp_forward.1} parent=0 // pred_check
    _
  $region31: #{mlp_forward.1} parent=0 // pred_check_branch
    %424 = sbr.rel (0) target = $region33
  $region32: #{mlp_forward.1} parent=0 // pred_region
    _
  $region33: #{mlp_forward.1} parent=0 // pred_fallthru
    _
  // Predicated region
  $region34: #{mlp_forward.1} parent=0 // pred_check
    _
  $region35: #{mlp_forward.1} parent=0 // pred_check_branch
    %426 = sbr.rel (0) target = $region37
  $region36: #{mlp_forward.1} parent=0 // pred_region
    _
  $region37: #{mlp_forward.1} parent=0 // pred_fallthru
    _

</llo_original>
